<compile_context>
chip_gen: v7x
topology: tpu7x:2x2x1
jax: 0.10.0
libtpu: 0.0.40
codegen_flags: <defaults>
</compile_context>

<pallas_src>
import jax
import jax.numpy as jnp
from jax import lax
from jax.experimental import pallas as pl
from jax.experimental.pallas import tpu as pltpu


def _round_up(x, m):
    return ((x + m - 1) // m) * m


# --------------------------- Stage 1: fused MLP -----------------------------
def _mlp_kernel(x_ref, w1_ref, b1_ref, w2_ref, b2_ref, z_ref):
    """z = relu(x @ W1 + b1) @ W2 + b2 for one row tile of the flattened x."""
    x = x_ref[...]
    # Layer 1 on the MXU with f32 accumulation; bias broadcast happens once
    # per grid step (no inner loops -> no repeated broadcast_in_dim).
    h = jnp.dot(x, w1_ref[...], preferred_element_type=jnp.float32) + b1_ref[...]
    h = jnp.maximum(h, 0.0)                        # activation = ReLU
    # Feed layer 2 at the compute dtype (bf16 fast path on all gens).
    h = h.astype(w2_ref.dtype)
    z = jnp.dot(h, w2_ref[...], preferred_element_type=jnp.float32) + b2_ref[...]
    z_ref[...] = z.astype(z_ref.dtype)


# --------------------------- Stage 2: tiled Gram ----------------------------
def _gram_kernel(zi_ref, zj_ref, o_ref):
    """Output tile = z_i @ z_j^T with the transpose folded into the MXU feed.

    lax.dot_general contracts the LAST dims of both operands, so no explicit
    (tm, H1) -> (H1, tm) materialization / XLU transpose is requested.  (If a
    future Mosaic version emits a vxpose here, emit z as (B, H1, N) once in
    stage 1 instead -- verify with pl.lower_as_mlir.)
    """
    o_ref[0] = lax.dot_general(
        zi_ref[0], zj_ref[0],
        dimension_numbers=(((1,), (1,)), ((), ())),
        preferred_element_type=jnp.float32,
    ).astype(o_ref.dtype)


def _xla_forward(x, w1, b1, w2, b2, cdt, out_dtype):
    """Plain-XLA path for lane-sparse / tiny shapes (N < 128)."""
    xf = x.astype(cdt)
    h = jnp.einsum("bnf,fh->bnh", xf, w1.astype(cdt),
                   preferred_element_type=jnp.float32) + b1.astype(jnp.float32)
    h = jnp.maximum(h, 0.0).astype(cdt)
    z = jnp.einsum("bnh,hk->bnk", h, w2.astype(cdt),
                   preferred_element_type=jnp.float32) + b2.astype(jnp.float32)
    z = z.astype(cdt)
    out = jnp.einsum("bik,bjk->bij", z, z, preferred_element_type=jnp.float32)
    return out.astype(out_dtype)


def gae_adj_net(x, adj, mask, w1, b1, w2, b2, *,
                compute_dtype=jnp.bfloat16, out_dtype=jnp.float32,
                mlp_row_tile=4096, gram_tile=512, min_pallas_n=128):
    """x: [B,N,F_in]; adj, mask unused (matching the PyTorch forward).

    compute_dtype: MXU operand dtype (bf16 default; f32 accumulation is always
    kept via preferred_element_type).  out_dtype: Gram output dtype.
    """
    del adj, mask  # adj is overwritten, mask is unused in the reference forward
    B, N, F_in = x.shape
    H0, H1 = w1.shape[1], w2.shape[1]
    b1 = b1.reshape(1, H0)
    b2 = b2.reshape(1, H1)
    cdt = jnp.dtype(compute_dtype) if compute_dtype is not None else x.dtype

    # Lane-sparse output (N < 128) -> masked partial stores + per-step overhead
    # dominate; a plain einsum wins.
    if N < min_pallas_n:
        return _xla_forward(x, w1, b1, w2, b2, cdt, out_dtype)

    op_bytes = jnp.dtype(cdt).itemsize
    align = 16 if op_bytes == 2 else 8          # bf16 packs 2 rows / sublane

    # -------- Stage 1: MLP fused over all B*N rows (one MXU-shaped chain) ----
    x_flat = x.reshape(B * N, F_in).astype(cdt)
    w1c, w2c = w1.astype(cdt), w2.astype(cdt)
    b1f, b2f = b1.astype(jnp.float32), b2.astype(jnp.float32)

    bn = B * N
    mlp_row_tile = max(align, (mlp_row_tile // align) * align)
    if bn > mlp_row_tile:
        tm_mlp = mlp_row_tile
    else:
        # Split into >= 2 row blocks so v7x's second TensorCore gets work.
        tm_mlp = max(align, _round_up(pl.cdiv(bn, 2), align))

    z_flat = pl.pallas_call(
        _mlp_kernel,
        out_shape=jax.ShapeDtypeStruct((bn, H1), cdt),
        grid_spec=pltpu.PrefetchScalarGridSpec(
            num_scalar_prefetch=0,
            grid=(pl.cdiv(bn, tm_mlp),),
            in_specs=[
                pl.BlockSpec((tm_mlp, F_in), lambda i: (i, 0)),  # x row tile
                pl.BlockSpec((F_in, H0), lambda i: (0, 0)),      # W1 (constant)
                pl.BlockSpec((1, H0), lambda i: (0, 0)),         # b1 (constant)
                pl.BlockSpec((H0, H1), lambda i: (0, 0)),        # W2 (constant)
                pl.BlockSpec((1, H1), lambda i: (0, 0)),         # b2 (constant)
            ],
            out_specs=pl.BlockSpec((tm_mlp, H1), lambda i: (i, 0)),
        ),
        compiler_params=pltpu.CompilerParams(
            dimension_semantics=("parallel",)),
    )(x_flat, w1c, b1f, w2c, b2f)

    z = z_flat.reshape(B, N, H1)   # contiguous reshape, no copy / no padding

    # -------- Stage 2: tiled Gram matrix  out[b] = z[b] @ z[b]^T -------------
    gram_tile = max(128, (gram_tile // 128) * 128)   # keep lane-aligned cap
    if N > gram_tile:
        tm = gram_tile
    elif B == 1 and N >= 256:
        # >= 2 row blocks so both v7x TensorCores are busy for single-batch.
        tm = _round_up(pl.cdiv(N, 2), 128)
    else:
        tm = N                                        # single full-dim block

    out_bytes = jnp.dtype(out_dtype).itemsize
    gram_step_vmem = 2 * tm * tm * out_bytes + 4 * tm * H1 * op_bytes
    cp_kwargs = dict(dimension_semantics=("parallel", "parallel", "parallel"))
    if gram_step_vmem > (12 << 20):
        # Only needed for user-raised tiles; stay under v7x's 64 MiB physical.
        cp_kwargs["vmem_limit_bytes"] = int(min(gram_step_vmem + (8 << 20),
                                                56 << 20))

    out = pl.pallas_call(
        _gram_kernel,
        out_shape=jax.ShapeDtypeStruct((B, N, N), out_dtype),
        grid_spec=pltpu.PrefetchScalarGridSpec(
            num_scalar_prefetch=0,
            grid=(B, pl.cdiv(N, tm), pl.cdiv(N, tm)),
            in_specs=[
                pl.BlockSpec((1, tm, H1), lambda b, i, j: (b, i, 0)),  # z rows
                pl.BlockSpec((1, tm, H1), lambda b, i, j: (b, j, 0)),  # z cols
            ],
            out_specs=pl.BlockSpec((1, tm, tm), lambda b, i, j: (b, i, j)),
        ),
        compiler_params=pltpu.CompilerParams(**cp_kwargs),
    )(z, z)
    return out


def _reference(x, w1, b1, w2, b2):
    h = jnp.maximum(jnp.einsum("bnf,fh->bnh", x, w1) + b1.reshape(1, 1, -1), 0.0)
    z = jnp.einsum("bnh,hk->bnk", h, w2) + b2.reshape(1, 1, -1)
    return jnp.einsum("bik,bjk->bij", z, z)


if __name__ == "__main__":
    # Small shapes consistent with the module's forward signature.  N = 128
    # keeps the Gram output lane-dense so the Pallas path is exercised.
    B, N, F_IN = 2, 128, 8
    HIDDEN = [32, 16]  # hidden_sizes -> Linear(8,32), ReLU, Linear(32,16)

    key = jax.random.PRNGKey(0)
    kx, ka, kw1, kb1, kw2, kb2 = jax.random.split(key, 6)

    x = jax.random.normal(kx, (B, N, F_IN), dtype=jnp.float32)
    adj_in = jax.random.normal(ka, (B, N, N), dtype=jnp.float32)   # ignored
    mask = jnp.ones((B, N), dtype=jnp.float32)                     # ignored

    # Deterministic parameter init (scaled normals); stored as [F_in, F_out].
    w1 = jax.random.normal(kw1, (F_IN, HIDDEN[0]), dtype=jnp.float32) * 0.1
    b1 = jax.random.normal(kb1, (1, HIDDEN[0]), dtype=jnp.float32) * 0.1
    w2 = jax.random.normal(kw2, (HIDDEN[0], HIDDEN[1]), dtype=jnp.float32) * 0.1
    b2 = jax.random.normal(kb2, (1, HIDDEN[1]), dtype=jnp.float32) * 0.1

    ref = _reference(x, w1, b1, w2, b2)

    # (a) f32-operand Pallas path: tight tolerance vs reference.
    out_f32 = jax.block_until_ready(
        gae_adj_net(x, adj_in, mask, w1, b1, w2, b2, compute_dtype=jnp.float32))
    assert out_f32.shape == (B, N, N)
    assert jnp.allclose(out_f32, ref, atol=1e-4, rtol=1e-4), "f32 path mismatch"

    # (b) default bf16-operand path (f32 accumulation): looser tolerance.
    out_bf16 = jax.block_until_ready(
        gae_adj_net(x, adj_in, mask, w1, b1, w2, b2))
    assert out_bf16.shape == (B, N, N)
    assert jnp.allclose(out_bf16, ref, atol=3e-2, rtol=3e-2), "bf16 path mismatch"

    # (c) tiny / lane-sparse shape takes the XLA fallback path.
    Nt = 16
    out_tiny = jax.block_until_ready(
        gae_adj_net(x[:, :Nt], adj_in[:, :Nt, :Nt], mask[:, :Nt],
                    w1, b1, w2, b2, compute_dtype=jnp.float32))
    ref_tiny = _reference(x[:, :Nt], w1, b1, w2, b2)
    assert out_tiny.shape == (B, Nt, Nt)
    assert jnp.allclose(out_tiny, ref_tiny, atol=1e-4, rtol=1e-4), "tiny mismatch"

    print("KERNEL_OK")
</pallas_src>

<mosaic_0001>
module attributes {stable_mosaic.version = 11 : i64} {
  func.func @_mlp_kernel(%arg0: i32, %arg1: memref<128x8xf32, #tpu.memory_space<vmem>>, %arg2: memref<8x32xf32, #tpu.memory_space<vmem>>, %arg3: memref<1x32xf32, #tpu.memory_space<vmem>>, %arg4: memref<32x16xf32, #tpu.memory_space<vmem>>, %arg5: memref<1x16xf32, #tpu.memory_space<vmem>>, %arg6: memref<128x16xf32, #tpu.memory_space<vmem>>) attributes {dimension_semantics = [#tpu.dimension_semantics<parallel>], iteration_bounds = array<i64: 2>, scalar_prefetch = 0 : i64, scratch_operands = 0 : i64, tpu.core_type = #tpu.core_type<tc>, window_params = [{transform_indices = @transform_0, window_bounds = array<i64: 128, 8>}, {pipeline_mode = #tpu.pipeline_mode<synchronous>, transform_indices = @transform_1, window_bounds = array<i64: 8, 32>}, {pipeline_mode = #tpu.pipeline_mode<synchronous>, transform_indices = @transform_2, window_bounds = array<i64: 1, 32>}, {pipeline_mode = #tpu.pipeline_mode<synchronous>, transform_indices = @transform_3, window_bounds = array<i64: 32, 16>}, {pipeline_mode = #tpu.pipeline_mode<synchronous>, transform_indices = @transform_4, window_bounds = array<i64: 1, 16>}, {transform_indices = @transform_5, window_bounds = array<i64: 128, 16>}]} {
    %c0 = arith.constant 0 : index
    %c0_0 = arith.constant 0 : index
    %0 = vector.load %arg1[%c0, %c0_0] : memref<128x8xf32, #tpu.memory_space<vmem>>, vector<128x8xf32>
    %c0_1 = arith.constant 0 : index
    %c0_2 = arith.constant 0 : index
    %1 = vector.load %arg2[%c0_1, %c0_2] : memref<8x32xf32, #tpu.memory_space<vmem>>, vector<8x32xf32>
    %cst = arith.constant dense<0.000000e+00> : vector<128x32xf32>
    %2 = tpu.matmul %0, %1, %cst {dimension_numbers = #tpu.dot_dimension_numbers<[1], [0], [0], [1], [0, 0, 1, 1], [], []>} : vector<128x8xf32>, vector<8x32xf32>, vector<128x32xf32> -> vector<128x32xf32>
    %c0_3 = arith.constant 0 : index
    %c0_4 = arith.constant 0 : index
    %3 = vector.load %arg3[%c0_3, %c0_4] : memref<1x32xf32, #tpu.memory_space<vmem>>, vector<1x32xf32>
    %4 = vector.broadcast %3 : vector<1x32xf32> to vector<128x32xf32>
    %5 = arith.addf %2, %4 : vector<128x32xf32>
    %cst_5 = arith.constant 0.000000e+00 : f32
    %6 = vector.broadcast %cst_5 : f32 to vector<128x32xf32>
    %7 = arith.maximumf %5, %6 : vector<128x32xf32>
    %c0_6 = arith.constant 0 : index
    %c0_7 = arith.constant 0 : index
    %8 = vector.load %arg4[%c0_6, %c0_7] : memref<32x16xf32, #tpu.memory_space<vmem>>, vector<32x16xf32>
    %cst_8 = arith.constant dense<0.000000e+00> : vector<128x16xf32>
    %9 = tpu.matmul %7, %8, %cst_8 {dimension_numbers = #tpu.dot_dimension_numbers<[1], [0], [0], [1], [0, 0, 1, 1], [], []>} : vector<128x32xf32>, vector<32x16xf32>, vector<128x16xf32> -> vector<128x16xf32>
    %c0_9 = arith.constant 0 : index
    %c0_10 = arith.constant 0 : index
    %10 = vector.load %arg5[%c0_9, %c0_10] : memref<1x16xf32, #tpu.memory_space<vmem>>, vector<1x16xf32>
    %11 = vector.broadcast %10 : vector<1x16xf32> to vector<128x16xf32>
    %12 = arith.addf %9, %11 : vector<128x16xf32>
    %c0_11 = arith.constant 0 : index
    %c0_12 = arith.constant 0 : index
    %13 = vector.load %arg6[%c0_11, %c0_12] : memref<128x16xf32, #tpu.memory_space<vmem>>, vector<128x16xf32>
    tpu.vector_store %arg6[%c0_11, %c0_12], %12 {strides = array<i32>} : memref<128x16xf32, #tpu.memory_space<vmem>>, vector<128x16xf32>,
    return
  }
  func.func @transform_0(%arg0: i32) -> (i32, i32) {
    %c0_i32 = arith.constant 0 : i32
    %c0_i32_0 = arith.constant 0 : i32
    return %arg0, %c0_i32 : i32, i32
  }
  func.func @transform_1(%arg0: i32) -> (i32, i32) {
    %c0_i32 = arith.constant 0 : i32
    %c0_i32_0 = arith.constant 0 : i32
    %c0_i32_1 = arith.constant 0 : i32
    return %c0_i32, %c0_i32_0 : i32, i32
  }
  func.func @transform_2(%arg0: i32) -> (i32, i32) {
    %c0_i32 = arith.constant 0 : i32
    %c0_i32_0 = arith.constant 0 : i32
    %c0_i32_1 = arith.constant 0 : i32
    return %c0_i32, %c0_i32_0 : i32, i32
  }
  func.func @transform_3(%arg0: i32) -> (i32, i32) {
    %c0_i32 = arith.constant 0 : i32
    %c0_i32_0 = arith.constant 0 : i32
    %c0_i32_1 = arith.constant 0 : i32
    return %c0_i32, %c0_i32_0 : i32, i32
  }
  func.func @transform_4(%arg0: i32) -> (i32, i32) {
    %c0_i32 = arith.constant 0 : i32
    %c0_i32_0 = arith.constant 0 : i32
    %c0_i32_1 = arith.constant 0 : i32
    return %c0_i32, %c0_i32_0 : i32, i32
  }
  func.func @transform_5(%arg0: i32) -> (i32, i32) {
    %c0_i32 = arith.constant 0 : i32
    %c0_i32_0 = arith.constant 0 : i32
    return %arg0, %c0_i32 : i32, i32
  }
}

</mosaic_0001>

<llo_original>
// kernel: tpu_custom_call.1
$region0: #{tpu_custom_call.1}
  #allocation0 [shape = 'u32[]', space=smem, size = 0x4, offset = 0x4, fixed_abs, tag = 'smem constant byte address 0x4 - core index']
  #allocation1 [shape = 'u32[144,128]{1,0:T(1,128)}', space=vmem, size = 0x12000, scoped, tag = 'internal scratch']
  %s0 = inlined_call_operand.vmem [shape: f32[256,8], index: 0, kind: input, shape index: {}]
  %s1 = inlined_call_operand.vmem [shape: f32[8,32], index: 1, kind: input, shape index: {}]
  %s2 = inlined_call_operand.vmem [shape: f32[1,32], index: 2, kind: input, shape index: {}]
  %s3 = inlined_call_operand.vmem [shape: f32[32,16], index: 3, kind: input, shape index: {}]
  %s4 = inlined_call_operand.vmem [shape: f32[1,16], index: 4, kind: input, shape index: {}]
  %s5 = inlined_call_operand.vmem [shape: f32[256,16], index: 5, kind: output, shape index: {}]
  %s6 = sld [smem:[#allocation0]]
  $region53: #{tpu_custom_call.1} parent=0
    _
  %s8 = ssub.s32 1, %s6
  %s9 = scalar_select 0, %s8, %s6
  loop: start=0, step=1, limit=4
  $region2: #{tpu_custom_call.1} parent=0 // loop_pre_header
    _
  $region3: #{tpu_custom_call.1} parent=0 // loop_header
    %s11 = sphi 0, %s15
    %p12 = scmp.ge.s32.totalorder %s11, 4
    %s21 = sphi 0, %s23
    %s24 = sphi 0, %s21
    %s25 = sphi 0, %s24
    %s41 = sphi 0, %s25
    %s45 = sphi 0, %s45
    %s47 = sphi 0, %s45
    %s48 = sphi 0, %s47
    %s62 = sphi 0, %s48
    %s66 = sphi 0, %s66
    %s68 = sphi 0, %s66
    %s69 = sphi 0, %s68
    %s83 = sphi 0, %s69
    %s87 = sphi 0, %s87
    %s89 = sphi 0, %s87
    %s90 = sphi 0, %s89
    %s104 = sphi 0, %s90
    %s108 = sphi 0, %s108
    %s110 = sphi 0, %s108
    %s111 = sphi 0, %s110
    %s125 = sphi 0, %s111
    %s131 = sphi 0, %s133
    %s134 = sphi 0, %s131
    %s135 = sphi 0, %s134
    %s151 = sphi 0, %s135
  $region4: #{tpu_custom_call.1} parent=0 // loop_header_branch
    %14 = sbr.rel (%p12) target = $region8
  $region5: #{tpu_custom_call.1} parent=0 // loop_body
    %s16 = ssub.s32 %s11, 1
    %s17 = ssub.s32 %s11, 2
    %s18 = sadd.s32 %s11, 1
    %s19 = ssub.s32 %s11, %s18
    %p20 = scmp.eq.s32.totalorder %s19, 0
    %s22 = sadd.s32 %s21, 1
    %s23 = scalar_select %p20, %s21, %s22
    %p26 = pneg %p20
    %p27 = scmp.eq.s32.totalorder %s11, 1
    %p28 = por %p26, %p27
    %p29 = scmp.ne.s32.totalorder %s21, %s24
    %p30 = scmp.eq.s32.totalorder %s11, 0
    %p31 = por %p29, %p30
    %p32 = scmp.ne.s32.totalorder %s21, %s24
    %p33 = scmp.eq.s32.totalorder %s16, 1
    %p34 = por %p32, %p33
    %p35 = scmp.ne.s32.totalorder %s24, %s25
    %p36 = scmp.eq.s32.totalorder %s16, 0
    %p37 = por %p35, %p36
    %p38 = scmp.ne.s32.totalorder %s24, %s25
    %p39 = scmp.eq.s32.totalorder %s17, 1
    %p40 = por %p38, %p39
    %p42 = scmp.ne.s32.totalorder %s25, %s41
    %p43 = scmp.eq.s32.totalorder %s17, 0
    %p44 = por %p42, %p43
    %s46 = sadd.s32 %s45, 1
    %p49 = scmp.eq.s32.totalorder %s11, 1
    %p50 = scmp.ne.s32.totalorder %s45, %s47
    %p51 = scmp.eq.s32.totalorder %s11, 0
    %p52 = por %p50, %p51
    %p53 = scmp.ne.s32.totalorder %s45, %s47
    %p54 = scmp.eq.s32.totalorder %s16, 1
    %p55 = por %p53, %p54
    %p56 = scmp.ne.s32.totalorder %s47, %s48
    %p57 = scmp.eq.s32.totalorder %s16, 0
    %p58 = por %p56, %p57
    %p59 = scmp.ne.s32.totalorder %s47, %s48
    %p60 = scmp.eq.s32.totalorder %s17, 1
    %p61 = por %p59, %p60
    %p63 = scmp.ne.s32.totalorder %s48, %s62
    %p64 = scmp.eq.s32.totalorder %s17, 0
    %p65 = por %p63, %p64
    %s67 = sadd.s32 %s66, 1
    %p70 = scmp.eq.s32.totalorder %s11, 1
    %p71 = scmp.ne.s32.totalorder %s66, %s68
    %p72 = scmp.eq.s32.totalorder %s11, 0
    %p73 = por %p71, %p72
    %p74 = scmp.ne.s32.totalorder %s66, %s68
    %p75 = scmp.eq.s32.totalorder %s16, 1
    %p76 = por %p74, %p75
    %p77 = scmp.ne.s32.totalorder %s68, %s69
    %p78 = scmp.eq.s32.totalorder %s16, 0
    %p79 = por %p77, %p78
    %p80 = scmp.ne.s32.totalorder %s68, %s69
    %p81 = scmp.eq.s32.totalorder %s17, 1
    %p82 = por %p80, %p81
    %p84 = scmp.ne.s32.totalorder %s69, %s83
    %p85 = scmp.eq.s32.totalorder %s17, 0
    %p86 = por %p84, %p85
    %s88 = sadd.s32 %s87, 1
    %p91 = scmp.eq.s32.totalorder %s11, 1
    %p92 = scmp.ne.s32.totalorder %s87, %s89
    %p93 = scmp.eq.s32.totalorder %s11, 0
    %p94 = por %p92, %p93
    %p95 = scmp.ne.s32.totalorder %s87, %s89
    %p96 = scmp.eq.s32.totalorder %s16, 1
    %p97 = por %p95, %p96
    %p98 = scmp.ne.s32.totalorder %s89, %s90
    %p99 = scmp.eq.s32.totalorder %s16, 0
    %p100 = por %p98, %p99
    %p101 = scmp.ne.s32.totalorder %s89, %s90
    %p102 = scmp.eq.s32.totalorder %s17, 1
    %p103 = por %p101, %p102
    %p105 = scmp.ne.s32.totalorder %s90, %s104
    %p106 = scmp.eq.s32.totalorder %s17, 0
    %p107 = por %p105, %p106
    %s109 = sadd.s32 %s108, 1
    %p112 = scmp.eq.s32.totalorder %s11, 1
    %p113 = scmp.ne.s32.totalorder %s108, %s110
    %p114 = scmp.eq.s32.totalorder %s11, 0
    %p115 = por %p113, %p114
    %p116 = scmp.ne.s32.totalorder %s108, %s110
    %p117 = scmp.eq.s32.totalorder %s16, 1
    %p118 = por %p116, %p117
    %p119 = scmp.ne.s32.totalorder %s110, %s111
    %p120 = scmp.eq.s32.totalorder %s16, 0
    %p121 = por %p119, %p120
    %p122 = scmp.ne.s32.totalorder %s110, %s111
    %p123 = scmp.eq.s32.totalorder %s17, 1
    %p124 = por %p122, %p123
    %p126 = scmp.ne.s32.totalorder %s111, %s125
    %p127 = scmp.eq.s32.totalorder %s17, 0
    %p128 = por %p126, %p127
    %s129 = ssub.s32 %s11, %s18
    %p130 = scmp.eq.s32.totalorder %s129, 0
    %s132 = sadd.s32 %s131, 1
    %s133 = scalar_select %p130, %s131, %s132
    %p136 = pneg %p130
    %p137 = scmp.eq.s32.totalorder %s11, 1
    %p138 = por %p136, %p137
    %p139 = scmp.ne.s32.totalorder %s131, %s134
    %p140 = scmp.eq.s32.totalorder %s11, 0
    %p141 = por %p139, %p140
    %p142 = scmp.ne.s32.totalorder %s131, %s134
    %p143 = scmp.eq.s32.totalorder %s16, 1
    %p144 = por %p142, %p143
    %p145 = scmp.ne.s32.totalorder %s134, %s135
    %p146 = scmp.eq.s32.totalorder %s16, 0
    %p147 = por %p145, %p146
    %p148 = scmp.ne.s32.totalorder %s134, %s135
    %p149 = scmp.eq.s32.totalorder %s17, 1
    %p150 = por %p148, %p149
    %p152 = scmp.ne.s32.totalorder %s135, %s151
    %p153 = scmp.eq.s32.totalorder %s17, 0
    %p154 = por %p152, %p153
    %p155 = scmp.le.s32.totalorder 1, %s11
    %p156 = scmp.lt.s32.totalorder %s11, 3
    %p157 = pnand %p155, %p156
    %p158 = pneg %p157
    // Predicated region
    $region9: #{tpu_custom_call.1} parent=5 // pred_check
      _
    $region10: #{tpu_custom_call.1} parent=5 // pred_check_branch
      %160 = sbr.rel (%p157) target = $region12
    $region11: #{tpu_custom_call.1} parent=5 // pred_region
      %s161 = ssub.s32 %s11, 1
      // Predicated region
      $region13: #{tpu_custom_call.1} parent=11 // pred_check
        %p162 = pneg %p58
      $region14: #{tpu_custom_call.1} parent=11 // pred_check_branch
        %164 = sbr.rel (%p162) target = $region16
      $region15: #{tpu_custom_call.1} parent=11 // pred_region
        _
      $region16: #{tpu_custom_call.1} parent=11 // pred_fallthru
        _
      // Predicated region
      $region17: #{tpu_custom_call.1} parent=11 // pred_check
        %p165 = pneg %p79
      $region18: #{tpu_custom_call.1} parent=11 // pred_check_branch
        %167 = sbr.rel (%p165) target = $region20
      $region19: #{tpu_custom_call.1} parent=11 // pred_region
        _
      $region20: #{tpu_custom_call.1} parent=11 // pred_fallthru
        _
      // Predicated region
      $region21: #{tpu_custom_call.1} parent=11 // pred_check
        %p168 = pneg %p100
      $region22: #{tpu_custom_call.1} parent=11 // pred_check_branch
        %170 = sbr.rel (%p168) target = $region24
      $region23: #{tpu_custom_call.1} parent=11 // pred_region
        _
      $region24: #{tpu_custom_call.1} parent=11 // pred_fallthru
        _
      // Predicated region
      $region25: #{tpu_custom_call.1} parent=11 // pred_check
        %p171 = pneg %p121
      $region26: #{tpu_custom_call.1} parent=11 // pred_check_branch
        %173 = sbr.rel (%p171) target = $region28
      $region27: #{tpu_custom_call.1} parent=11 // pred_region
        _
      $region28: #{tpu_custom_call.1} parent=11 // pred_fallthru
        _
    $region12: #{tpu_custom_call.1} parent=5 // pred_fallthru
      _
    %p174 = scmp.lt.s32.totalorder %s11, 2
    // Predicated region
    $region29: #{tpu_custom_call.1} parent=5 // pred_check
      %p175 = pneg %p174
    $region30: #{tpu_custom_call.1} parent=5 // pred_check_branch
      %177 = sbr.rel (%p175) target = $region32
    $region31: #{tpu_custom_call.1} parent=5 // pred_region
      // Predicated region
      $region33: #{tpu_custom_call.1} parent=31 // pred_check
        %p178 = pneg %p31
      $region34: #{tpu_custom_call.1} parent=31 // pred_check_branch
        %180 = sbr.rel (%p178) target = $region36
      $region35: #{tpu_custom_call.1} parent=31 // pred_region
        %s181 = smul.u32 16, %s11
        %p182 = scmp.lt.s32.totalorder %s181, 31
        %s183 = scalar_select %p182, %s181, 31
        %s184 = smul.addr %s183, 8
        %s185 = scalar_lea.vmem %s0, %s184
        %s186 = smul.u32 16, %s11
      $region36: #{tpu_custom_call.1} parent=31 // pred_fallthru
        _
    $region32: #{tpu_custom_call.1} parent=5 // pred_fallthru
      _
    %p187 = scmp.le.s32.totalorder 1, %s11
    %p188 = scmp.lt.s32.totalorder %s11, 3
    %p189 = pnand %p187, %p188
    %p190 = pneg %p189
    // Predicated region
    $region37: #{tpu_custom_call.1} parent=5 // pred_check
      _
    $region38: #{tpu_custom_call.1} parent=5 // pred_check_branch
      %192 = sbr.rel (%p189) target = $region40
    $region39: #{tpu_custom_call.1} parent=5 // pred_region
      %s193 = ssub.s32 %s11, 1
      %s194 = smul.u32 16, %s16
      %p195 = scmp.lt.s32.totalorder %s194, 31
      %s196 = scalar_select %p195, %s194, 31
      %s197 = smul.addr %s196, 8
      %s198 = scalar_lea.vmem %s0, %s197
      %p199 = pneg %p37
      %p200 = pneg %p34
      %p201 = pneg %p58
      %p202 = pneg %p55
      %p203 = pneg %p79
      %p204 = pneg %p76
      %p205 = pneg %p100
      %p206 = pneg %p97
      %p207 = pneg %p121
      %p208 = pneg %p118
      %p209 = pneg %p147
      %p210 = pneg %p144
      %s211 = smul.u32 16, %s16
      %p212 = scmp.lt.s32.totalorder %s211, 31
      %s213 = scalar_select %p212, %s211, 31
      %s214 = smul.addr %s213, 8
      %s215 = scalar_lea.vmem %s5, %s214
      %s216 = smul.u32 16, %s16
      %p217 = scmp.lt.s32.totalorder %s216, 31
      %s218 = scalar_select %p217, %s216, 31
      %s219 = smul.addr %s218, 8
      %s220 = scalar_lea.vmem %s0, %s219
      %s221 = smul.u32 16, %s16
      %s222 = smul.u32 16, %s16
      %p223 = scmp.lt.s32.totalorder %s222, 31
      %s224 = scalar_select %p223, %s222, 31
      %s225 = smul.addr %s224, 8
      %s226 = scalar_lea.vmem %s5, %s225
      %s227 = smul.u32 16, %s16
      %v228 = vld [vmem:[%s220] sm:$0xff]
      %v229 = vld [vmem:[%s220 + $0x8] sm:$0xff]
      %v230 = vld [vmem:[%s220 + $0x10] sm:$0xff]
      %v231 = vld [vmem:[%s220 + $0x18] sm:$0xff]
      %v232 = vld [vmem:[%s220 + $0x20] sm:$0xff]
      %v233 = vld [vmem:[%s220 + $0x28] sm:$0xff]
      %v234 = vld [vmem:[%s220 + $0x30] sm:$0xff]
      %v235 = vld [vmem:[%s220 + $0x38] sm:$0xff]
      %v236 = vld [vmem:[%s220 + $0x40] sm:$0xff]
      %v237 = vld [vmem:[%s220 + $0x48] sm:$0xff]
      %v238 = vld [vmem:[%s220 + $0x50] sm:$0xff]
      %v239 = vld [vmem:[%s220 + $0x58] sm:$0xff]
      %v240 = vld [vmem:[%s220 + $0x60] sm:$0xff]
      %v241 = vld [vmem:[%s220 + $0x68] sm:$0xff]
      %v242 = vld [vmem:[%s220 + $0x70] sm:$0xff]
      %v243 = vld [vmem:[%s220 + $0x78] sm:$0xff]
      %v244 = vld [vmem:[%s1] sm:$0xff]
      %v245 = vld [vmem:[%s2] sm:$0x1]
      %v247 = vlaneseq
      %v248 = vshrl.u32 %v247, 7
      %v249 = vsub.s32 0, %v248
      %v250 = vrot.slane %v245, %v249
      %vm252 = vcmask 64512
      %v254 = vsel %vm252, %v228, 0
      %v257 = vsel %vm252, %v229, 0
      %v260 = vsel %vm252, %v230, 0
      %v263 = vsel %vm252, %v231, 0
      %v266 = vsel %vm252, %v232, 0
      %v269 = vsel %vm252, %v233, 0
      %v272 = vsel %vm252, %v234, 0
      %v275 = vsel %vm252, %v235, 0
      %v278 = vsel %vm252, %v236, 0
      %v281 = vsel %vm252, %v237, 0
      %v284 = vsel %vm252, %v238, 0
      %v287 = vsel %vm252, %v239, 0
      %v290 = vsel %vm252, %v240, 0
      %v293 = vsel %vm252, %v241, 0
      %v296 = vsel %vm252, %v242, 0
      %v299 = vsel %vm252, %v243, 0
      %301 = vmatprep.subr.mxu0 0.0
      %302 = vmatpush1.msra.mxu0 %v244
      %303 = vmatprep.subr.mxu0 0.0
      %304 = vmatpush1.msra.mxu0 0.0
      %305 = vmatprep.subr.mxu0 0.0
      %306 = vmatpush1.msra.mxu0 0.0
      %307 = vmatprep.subr.mxu0 0.0
      %308 = vmatpush1.msra.mxu0 0.0
      %309 = vmatprep.subr.mxu0 0.0
      %310 = vmatpush1.msra.mxu0 0.0
      %311 = vmatprep.subr.mxu0 0.0
      %312 = vmatpush1.msra.mxu0 0.0
      %313 = vmatprep.subr.mxu0 0.0
      %314 = vmatpush1.msra.mxu0 0.0
      %315 = vmatprep.subr.mxu0 0.0
      %316 = vmatpush1.msra.mxu0 0.0
      %317 = vmatprep.subr.mxu0 0.0
      %318 = vmatpush1.msra.mxu0 0.0
      %319 = vmatprep.subr.mxu0 0.0
      %320 = vmatpush1.msra.mxu0 0.0
      %321 = vmatprep.subr.mxu0 0.0
      %322 = vmatpush1.msra.mxu0 0.0
      %323 = vmatprep.subr.mxu0 0.0
      %324 = vmatpush1.msra.mxu0 0.0
      %325 = vmatprep.subr.mxu0 0.0
      %326 = vmatpush1.msra.mxu0 0.0
      %327 = vmatprep.subr.mxu0 0.0
      %328 = vmatpush1.msra.mxu0 0.0
      %329 = vmatprep.subr.mxu0 0.0
      %330 = vmatpush1.msra.mxu0 0.0
      %331 = vmatprep.subr.mxu0 0.0
      %332 = vmatpush1.msra.mxu0 0.0
      %333 = vmatprep.subr.mxu0 0.0
      %334 = vmatpush1.msra.mxu0 0.0
      %335 = vmatprep.subr.mxu0 0.0
      %336 = vmatpush1.msra.mxu0 0.0
      %337 = vmatprep.subr.mxu0 0.0
      %338 = vmatpush1.msra.mxu0 0.0
      %339 = vmatprep.subr.mxu0 0.0
      %340 = vmatpush1.msra.mxu0 0.0
      %341 = vmatprep.subr.mxu0 0.0
      %342 = vmatpush1.msra.mxu0 0.0
      %343 = vmatprep.subr.mxu0 0.0
      %344 = vmatpush1.msra.mxu0 0.0
      %345 = vmatprep.subr.mxu0 0.0
      %346 = vmatpush1.msra.mxu0 0.0
      %347 = vmatprep.subr.mxu0 0.0
      %348 = vmatpush1.msra.mxu0 0.0
      %349 = vmatprep.subr.mxu0 0.0
      %350 = vmatpush1.msra.mxu0 0.0
      %351 = vmatprep.subr.mxu0 0.0
      %352 = vmatpush1.msra.mxu0 0.0
      %353 = vmatprep.subr.mxu0 0.0
      %354 = vmatpush1.msra.mxu0 0.0
      %355 = vmatprep.subr.mxu0 0.0
      %356 = vmatpush1.msra.mxu0 0.0
      %357 = vmatprep.subr.mxu0 0.0
      %358 = vmatpush1.msra.mxu0 0.0
      %359 = vmatprep.subr.mxu0 0.0
      %360 = vmatpush1.msra.mxu0 0.0
      %361 = vmatprep.subr.mxu0 0.0
      %362 = vmatpush1.msra.mxu0 0.0
      %363 = vmatprep.subr.mxu0 0.0
      %364 = vmatpush1.msra.mxu0 0.0
      %365 = vmatprep.mubr.f32.mxu0 0.0
      %366 = vmatmul.mubr.f32.gmra.mrb[0].mxu0 %v254
      %v367 = vpop.f32.mrb[0].mxu0
      %v368 = vadd.f32 %v250, %v367
      %v369 = vpop.f32.mrb[0].mxu0
      %370 = vmatprep.mubr.f32.mxu0 0.0
      %371 = vmatmul.mubr.f32.gmra.mrb[0].mxu0 %v257
      %v372 = vpop.f32.mrb[0].mxu0
      %v373 = vadd.f32 %v250, %v372
      %v374 = vpop.f32.mrb[0].mxu0
      %375 = vmatprep.mubr.f32.mxu0 0.0
      %376 = vmatmul.mubr.f32.gmra.mrb[0].mxu0 %v260
      %v377 = vpop.f32.mrb[0].mxu0
      %v378 = vadd.f32 %v250, %v377
      %v379 = vpop.f32.mrb[0].mxu0
      %380 = vmatprep.mubr.f32.mxu0 0.0
      %381 = vmatmul.mubr.f32.gmra.mrb[0].mxu0 %v263
      %v382 = vpop.f32.mrb[0].mxu0
      %v383 = vadd.f32 %v250, %v382
      %v384 = vpop.f32.mrb[0].mxu0
      %385 = vmatprep.mubr.f32.mxu0 0.0
      %386 = vmatmul.mubr.f32.gmra.mrb[0].mxu0 %v266
      %v387 = vpop.f32.mrb[0].mxu0
      %v388 = vadd.f32 %v250, %v387
      %v389 = vpop.f32.mrb[0].mxu0
      %390 = vmatprep.mubr.f32.mxu0 0.0
      %391 = vmatmul.mubr.f32.gmra.mrb[0].mxu0 %v269
      %v392 = vpop.f32.mrb[0].mxu0
      %v393 = vadd.f32 %v250, %v392
      %v394 = vpop.f32.mrb[0].mxu0
      %395 = vmatprep.mubr.f32.mxu0 0.0
      %396 = vmatmul.mubr.f32.gmra.mrb[0].mxu0 %v272
      %v397 = vpop.f32.mrb[0].mxu0
      %v398 = vadd.f32 %v250, %v397
      %v399 = vpop.f32.mrb[0].mxu0
      %400 = vmatprep.mubr.f32.mxu0 0.0
      %401 = vmatmul.mubr.f32.gmra.mrb[0].mxu0 %v275
      %v402 = vpop.f32.mrb[0].mxu0
      %v403 = vadd.f32 %v250, %v402
      %v404 = vpop.f32.mrb[0].mxu0
      %405 = vmatprep.mubr.f32.mxu0 0.0
      %406 = vmatmul.mubr.f32.gmra.mrb[0].mxu0 %v278
      %v407 = vpop.f32.mrb[0].mxu0
      %v408 = vadd.f32 %v250, %v407
      %v409 = vpop.f32.mrb[0].mxu0
      %410 = vmatprep.mubr.f32.mxu0 0.0
      %411 = vmatmul.mubr.f32.gmra.mrb[0].mxu0 %v281
      %v412 = vpop.f32.mrb[0].mxu0
      %v413 = vadd.f32 %v250, %v412
      %v414 = vpop.f32.mrb[0].mxu0
      %415 = vmatprep.mubr.f32.mxu0 0.0
      %416 = vmatmul.mubr.f32.gmra.mrb[0].mxu0 %v284
      %v417 = vpop.f32.mrb[0].mxu0
      %v418 = vadd.f32 %v250, %v417
      %v419 = vpop.f32.mrb[0].mxu0
      %420 = vmatprep.mubr.f32.mxu0 0.0
      %421 = vmatmul.mubr.f32.gmra.mrb[0].mxu0 %v287
      %v422 = vpop.f32.mrb[0].mxu0
      %v423 = vadd.f32 %v250, %v422
      %v424 = vpop.f32.mrb[0].mxu0
      %425 = vmatprep.mubr.f32.mxu0 0.0
      %426 = vmatmul.mubr.f32.gmra.mrb[0].mxu0 %v290
      %v427 = vpop.f32.mrb[0].mxu0
      %v428 = vadd.f32 %v250, %v427
      %v429 = vpop.f32.mrb[0].mxu0
      %430 = vmatprep.mubr.f32.mxu0 0.0
      %431 = vmatmul.mubr.f32.gmra.mrb[0].mxu0 %v293
      %v432 = vpop.f32.mrb[0].mxu0
      %v433 = vadd.f32 %v250, %v432
      %v434 = vpop.f32.mrb[0].mxu0
      %435 = vmatprep.mubr.f32.mxu0 0.0
      %436 = vmatmul.mubr.f32.gmra.mrb[0].mxu0 %v296
      %v437 = vpop.f32.mrb[0].mxu0
      %v438 = vadd.f32 %v250, %v437
      %v439 = vpop.f32.mrb[0].mxu0
      %440 = vmatprep.mubr.f32.mxu0 0.0
      %441 = vmatmul.mubr.f32.gmra.mrb[0].mxu0 %v299
      %v442 = vpop.f32.mrb[0].mxu0
      %v443 = vadd.f32 %v250, %v442
      %v444 = vpop.f32.mrb[0].mxu0
      %445 = vdwg.mxu0
      %v446 = vmax.f32 %v368, 0.0
      %v447 = vmax.f32 %v373, 0.0
      %v448 = vmax.f32 %v378, 0.0
      %v449 = vmax.f32 %v383, 0.0
      %v450 = vmax.f32 %v388, 0.0
      %v451 = vmax.f32 %v393, 0.0
      %v452 = vmax.f32 %v398, 0.0
      %v453 = vmax.f32 %v403, 0.0
      %v454 = vmax.f32 %v408, 0.0
      %v455 = vmax.f32 %v413, 0.0
      %v456 = vmax.f32 %v418, 0.0
      %v457 = vmax.f32 %v423, 0.0
      %v458 = vmax.f32 %v428, 0.0
      %v459 = vmax.f32 %v433, 0.0
      %v460 = vmax.f32 %v438, 0.0
      %v461 = vmax.f32 %v443, 0.0
      %v462 = vld [vmem:[%s3] sm:$0xff]
      %v463 = vld [vmem:[%s3 + $0x8] sm:$0xff]
      %v464 = vld [vmem:[%s3 + $0x10] sm:$0xff]
      %v465 = vld [vmem:[%s3 + $0x18] sm:$0xff]
      %v466 = vld [vmem:[%s4] sm:$0x1]
      %v468 = vlaneseq
      %v469 = vshrl.u32 %v468, 7
      %v470 = vsub.s32 0, %v469
      %v471 = vrot.slane %v466, %v470
      %vm473 = vcmask 261120
      %v475 = vsel %vm473, %v446, 0
      %v478 = vsel %vm473, %v447, 0
      %v481 = vsel %vm473, %v448, 0
      %v484 = vsel %vm473, %v449, 0
      %v487 = vsel %vm473, %v450, 0
      %v490 = vsel %vm473, %v451, 0
      %v493 = vsel %vm473, %v452, 0
      %v496 = vsel %vm473, %v453, 0
      %v499 = vsel %vm473, %v454, 0
      %v502 = vsel %vm473, %v455, 0
      %v505 = vsel %vm473, %v456, 0
      %v508 = vsel %vm473, %v457, 0
      %v511 = vsel %vm473, %v458, 0
      %v514 = vsel %vm473, %v459, 0
      %v517 = vsel %vm473, %v460, 0
      %v520 = vsel %vm473, %v461, 0
      %522 = vmatprep.subr.mxu0 0.0
      %523 = vmatpush1.msra.mxu0 %v462
      %524 = vmatprep.subr.mxu0 0.0
      %525 = vmatpush1.msra.mxu0 %v463
      %526 = vmatprep.subr.mxu0 0.0
      %527 = vmatpush1.msra.mxu0 %v464
      %528 = vmatprep.subr.mxu0 0.0
      %529 = vmatpush1.msra.mxu0 %v465
      %530 = vmatprep.subr.mxu0 0.0
      %531 = vmatpush1.msra.mxu0 0.0
      %532 = vmatprep.subr.mxu0 0.0
      %533 = vmatpush1.msra.mxu0 0.0
      %534 = vmatprep.subr.mxu0 0.0
      %535 = vmatpush1.msra.mxu0 0.0
      %536 = vmatprep.subr.mxu0 0.0
      %537 = vmatpush1.msra.mxu0 0.0
      %538 = vmatprep.subr.mxu0 0.0
      %539 = vmatpush1.msra.mxu0 0.0
      %540 = vmatprep.subr.mxu0 0.0
      %541 = vmatpush1.msra.mxu0 0.0
      %542 = vmatprep.subr.mxu0 0.0
      %543 = vmatpush1.msra.mxu0 0.0
      %544 = vmatprep.subr.mxu0 0.0
      %545 = vmatpush1.msra.mxu0 0.0
      %546 = vmatprep.subr.mxu0 0.0
      %547 = vmatpush1.msra.mxu0 0.0
      %548 = vmatprep.subr.mxu0 0.0
      %549 = vmatpush1.msra.mxu0 0.0
      %550 = vmatprep.subr.mxu0 0.0
      %551 = vmatpush1.msra.mxu0 0.0
      %552 = vmatprep.subr.mxu0 0.0
      %553 = vmatpush1.msra.mxu0 0.0
      %554 = vmatprep.subr.mxu0 0.0
      %555 = vmatpush1.msra.mxu0 0.0
      %556 = vmatprep.subr.mxu0 0.0
      %557 = vmatpush1.msra.mxu0 0.0
      %558 = vmatprep.subr.mxu0 0.0
      %559 = vmatpush1.msra.mxu0 0.0
      %560 = vmatprep.subr.mxu0 0.0
      %561 = vmatpush1.msra.mxu0 0.0
      %562 = vmatprep.subr.mxu0 0.0
      %563 = vmatpush1.msra.mxu0 0.0
      %564 = vmatprep.subr.mxu0 0.0
      %565 = vmatpush1.msra.mxu0 0.0
      %566 = vmatprep.subr.mxu0 0.0
      %567 = vmatpush1.msra.mxu0 0.0
      %568 = vmatprep.subr.mxu0 0.0
      %569 = vmatpush1.msra.mxu0 0.0
      %570 = vmatprep.subr.mxu0 0.0
      %571 = vmatpush1.msra.mxu0 0.0
      %572 = vmatprep.subr.mxu0 0.0
      %573 = vmatpush1.msra.mxu0 0.0
      %574 = vmatprep.subr.mxu0 0.0
      %575 = vmatpush1.msra.mxu0 0.0
      %576 = vmatprep.subr.mxu0 0.0
      %577 = vmatpush1.msra.mxu0 0.0
      %578 = vmatprep.subr.mxu0 0.0
      %579 = vmatpush1.msra.mxu0 0.0
      %580 = vmatprep.subr.mxu0 0.0
      %581 = vmatpush1.msra.mxu0 0.0
      %582 = vmatprep.subr.mxu0 0.0
      %583 = vmatpush1.msra.mxu0 0.0
      %584 = vmatprep.subr.mxu0 0.0
      %585 = vmatpush1.msra.mxu0 0.0
      %586 = vmatprep.mubr.f32.mxu0 0.0
      %587 = vmatmul.mubr.f32.gmra.mrb[0].mxu0 %v475
      %v588 = vpop.f32.mrb[0].mxu0
      %v589 = vadd.f32 %v471, %v588
      %v590 = vpop.f32.mrb[0].mxu0
      %591 = vmatprep.mubr.f32.mxu0 0.0
      %592 = vmatmul.mubr.f32.gmra.mrb[0].mxu0 %v478
      %v593 = vpop.f32.mrb[0].mxu0
      %v594 = vadd.f32 %v471, %v593
      %v595 = vpop.f32.mrb[0].mxu0
      %596 = vmatprep.mubr.f32.mxu0 0.0
      %597 = vmatmul.mubr.f32.gmra.mrb[0].mxu0 %v481
      %v598 = vpop.f32.mrb[0].mxu0
      %v599 = vadd.f32 %v471, %v598
      %v600 = vpop.f32.mrb[0].mxu0
      %601 = vmatprep.mubr.f32.mxu0 0.0
      %602 = vmatmul.mubr.f32.gmra.mrb[0].mxu0 %v484
      %v603 = vpop.f32.mrb[0].mxu0
      %v604 = vadd.f32 %v471, %v603
      %v605 = vpop.f32.mrb[0].mxu0
      %606 = vmatprep.mubr.f32.mxu0 0.0
      %607 = vmatmul.mubr.f32.gmra.mrb[0].mxu0 %v487
      %v608 = vpop.f32.mrb[0].mxu0
      %v609 = vadd.f32 %v471, %v608
      %v610 = vpop.f32.mrb[0].mxu0
      %611 = vmatprep.mubr.f32.mxu0 0.0
      %612 = vmatmul.mubr.f32.gmra.mrb[0].mxu0 %v490
      %v613 = vpop.f32.mrb[0].mxu0
      %v614 = vadd.f32 %v471, %v613
      %v615 = vpop.f32.mrb[0].mxu0
      %616 = vmatprep.mubr.f32.mxu0 0.0
      %617 = vmatmul.mubr.f32.gmra.mrb[0].mxu0 %v493
      %v618 = vpop.f32.mrb[0].mxu0
      %v619 = vadd.f32 %v471, %v618
      %v620 = vpop.f32.mrb[0].mxu0
      %621 = vmatprep.mubr.f32.mxu0 0.0
      %622 = vmatmul.mubr.f32.gmra.mrb[0].mxu0 %v496
      %v623 = vpop.f32.mrb[0].mxu0
      %v624 = vadd.f32 %v471, %v623
      %v625 = vpop.f32.mrb[0].mxu0
      %626 = vmatprep.mubr.f32.mxu0 0.0
      %627 = vmatmul.mubr.f32.gmra.mrb[0].mxu0 %v499
      %v628 = vpop.f32.mrb[0].mxu0
      %v629 = vadd.f32 %v471, %v628
      %v630 = vpop.f32.mrb[0].mxu0
      %631 = vmatprep.mubr.f32.mxu0 0.0
      %632 = vmatmul.mubr.f32.gmra.mrb[0].mxu0 %v502
      %v633 = vpop.f32.mrb[0].mxu0
      %v634 = vadd.f32 %v471, %v633
      %v635 = vpop.f32.mrb[0].mxu0
      %636 = vmatprep.mubr.f32.mxu0 0.0
      %637 = vmatmul.mubr.f32.gmra.mrb[0].mxu0 %v505
      %v638 = vpop.f32.mrb[0].mxu0
      %v639 = vadd.f32 %v471, %v638
      %v640 = vpop.f32.mrb[0].mxu0
      %641 = vmatprep.mubr.f32.mxu0 0.0
      %642 = vmatmul.mubr.f32.gmra.mrb[0].mxu0 %v508
      %v643 = vpop.f32.mrb[0].mxu0
      %v644 = vadd.f32 %v471, %v643
      %v645 = vpop.f32.mrb[0].mxu0
      %646 = vmatprep.mubr.f32.mxu0 0.0
      %647 = vmatmul.mubr.f32.gmra.mrb[0].mxu0 %v511
      %v648 = vpop.f32.mrb[0].mxu0
      %v649 = vadd.f32 %v471, %v648
      %v650 = vpop.f32.mrb[0].mxu0
      %651 = vmatprep.mubr.f32.mxu0 0.0
      %652 = vmatmul.mubr.f32.gmra.mrb[0].mxu0 %v514
      %v653 = vpop.f32.mrb[0].mxu0
      %v654 = vadd.f32 %v471, %v653
      %v655 = vpop.f32.mrb[0].mxu0
      %656 = vmatprep.mubr.f32.mxu0 0.0
      %657 = vmatmul.mubr.f32.gmra.mrb[0].mxu0 %v517
      %v658 = vpop.f32.mrb[0].mxu0
      %v659 = vadd.f32 %v471, %v658
      %v660 = vpop.f32.mrb[0].mxu0
      %661 = vmatprep.mubr.f32.mxu0 0.0
      %662 = vmatmul.mubr.f32.gmra.mrb[0].mxu0 %v520
      %v663 = vpop.f32.mrb[0].mxu0
      %v664 = vadd.f32 %v471, %v663
      %v665 = vpop.f32.mrb[0].mxu0
      %666 = vdwg.mxu0
      %vm667 = vcmask 130048
      %668 = vst.msk [vmem:[%s226] sm:$0xff] %vm667, %v589
      %669 = vst.msk [vmem:[%s226 + $0x8] sm:$0xff] %vm667, %v594
      %670 = vst.msk [vmem:[%s226 + $0x10] sm:$0xff] %vm667, %v599
      %671 = vst.msk [vmem:[%s226 + $0x18] sm:$0xff] %vm667, %v604
      %672 = vst.msk [vmem:[%s226 + $0x20] sm:$0xff] %vm667, %v609
      %673 = vst.msk [vmem:[%s226 + $0x28] sm:$0xff] %vm667, %v614
      %674 = vst.msk [vmem:[%s226 + $0x30] sm:$0xff] %vm667, %v619
      %675 = vst.msk [vmem:[%s226 + $0x38] sm:$0xff] %vm667, %v624
      %676 = vst.msk [vmem:[%s226 + $0x40] sm:$0xff] %vm667, %v629
      %677 = vst.msk [vmem:[%s226 + $0x48] sm:$0xff] %vm667, %v634
      %678 = vst.msk [vmem:[%s226 + $0x50] sm:$0xff] %vm667, %v639
      %679 = vst.msk [vmem:[%s226 + $0x58] sm:$0xff] %vm667, %v644
      %680 = vst.msk [vmem:[%s226 + $0x60] sm:$0xff] %vm667, %v649
      %681 = vst.msk [vmem:[%s226 + $0x68] sm:$0xff] %vm667, %v654
      %682 = vst.msk [vmem:[%s226 + $0x70] sm:$0xff] %vm667, %v659
      %683 = vst.msk [vmem:[%s226 + $0x78] sm:$0xff] %vm667, %v664
      %s684 = smul.u32 16, %s16
      %p685 = scmp.lt.s32.totalorder %s684, 31
      %s686 = scalar_select %p685, %s684, 31
      %s687 = smul.addr %s686, 8
      %s688 = scalar_lea.vmem %s5, %s687
      // Predicated region
      $region41: #{tpu_custom_call.1} parent=39 // pred_check
        %p689 = pneg %p144
      $region42: #{tpu_custom_call.1} parent=39 // pred_check_branch
        %691 = sbr.rel (%p689) target = $region44
      $region43: #{tpu_custom_call.1} parent=39 // pred_region
        %s692 = smul.u32 16, %s16
      $region44: #{tpu_custom_call.1} parent=39 // pred_fallthru
        _
    $region40: #{tpu_custom_call.1} parent=5 // pred_fallthru
      _
    %p693 = scmp.le.s32.totalorder 2, %s11
    // Predicated region
    $region45: #{tpu_custom_call.1} parent=5 // pred_check
      %p694 = pneg %p693
    $region46: #{tpu_custom_call.1} parent=5 // pred_check_branch
      %696 = sbr.rel (%p694) target = $region48
    $region47: #{tpu_custom_call.1} parent=5 // pred_region
      %s697 = ssub.s32 %s11, 2
      // Predicated region
      $region49: #{tpu_custom_call.1} parent=47 // pred_check
        %p698 = pneg %p150
      $region50: #{tpu_custom_call.1} parent=47 // pred_check_branch
        %700 = sbr.rel (%p698) target = $region52
      $region51: #{tpu_custom_call.1} parent=47 // pred_region
        %s701 = smul.u32 16, %s17
        %p702 = scmp.lt.s32.totalorder %s701, 31
        %s703 = scalar_select %p702, %s701, 31
        %s704 = smul.addr %s703, 8
        %s705 = scalar_lea.vmem %s5, %s704
      $region52: #{tpu_custom_call.1} parent=47 // pred_fallthru
        _
    $region48: #{tpu_custom_call.1} parent=5 // pred_fallthru
      _
  $region6: #{tpu_custom_call.1} parent=0 // loop_footer
    %s15 = sadd.s32 1, %s11
  $region7: #{tpu_custom_call.1} parent=0 // loop_footer_branch
    %10 = sbr.rel target = $region3
  $region8: #{tpu_custom_call.1} parent=0 // loop_exit
    _

</llo_original>
